<compile_context>
chip_gen: v6e
topology: v6e:2x2x1
jax: 0.10.0
libtpu: 0.0.40
codegen_flags: <defaults>
</compile_context>

<pallas_src>
import math
from functools import partial

import jax
import jax.numpy as jnp
from jax.experimental import pallas as pl
from jax.experimental.pallas import tpu as pltpu

_HIGHEST = jax.lax.Precision.HIGHEST


# ----------------------------------------------------------------------------
# Pallas kernel: one lane-dense GEMM per batch tile
# ----------------------------------------------------------------------------
def _collapsed_gemm_kernel(x_ref, w_ref, b_ref, o_ref, *, precision):
    """o = x @ W + b for one (already lane-folded) batch tile.

    x_ref: (bm, G*P)      batch tile (G original rows folded per folded row)
    w_ref: (G*P, G*Dm)    block-diagonal kron(I_G, W_eff), VMEM-resident
    b_ref: (1, G*Dm)      tiled effective bias (float32)
    o_ref: (bm, G*Dm)     lane-dense output tile
    """
    acc = jnp.dot(x_ref[...], w_ref[...],
                  preferred_element_type=jnp.float32,
                  precision=precision)
    o_ref[...] = (acc + b_ref[...]).astype(o_ref.dtype)


# ----------------------------------------------------------------------------
# Wrapper: collapse the affine chain, fold lanes, tile the batch
# ----------------------------------------------------------------------------
def _collapse_to_affine(params, var_num):
    """Fold all attention layers + concat + out_linear into (W_eff, b_eff).

    For F == 1:  y_row = x_row @ W_eff + b_eff,
    W_eff: (P, d_model), b_eff: (1, d_model).
    """
    layer_num = params["layer_num"]
    w_out, b_out = params["out"]                       # (P*(L+1), Dm), (1, Dm)
    P = var_num
    d_model = w_out.shape[1]
    L1 = layer_num + 1

    # The module flattens cat([x0..xL]) p-major / stage-minor:
    # row j of w_out acts on (p = j // L1, stage = j % L1).
    w_stage = w_out.reshape(P, L1, d_model)            # [p, stage, dm]

    a = jnp.eye(P, dtype=jnp.float32)                  # x_i = x @ a + d
    d = jnp.zeros((1, P), dtype=jnp.float32)
    w_eff = w_stage[:, 0, :].astype(jnp.float32)       # stage-0 (raw input)
    b_eff = b_out.astype(jnp.float32)
    for i in range(layer_num):
        # AttentionLayer with sequence length 1: softmax == 1, so the layer is
        # exactly   x <- (x @ Wv + bv) @ Wo + bo   (Q/K projections are dead).
        _, _, _, _, wv, bv, wo, bo = params["attn"][i]
        m_i = jnp.dot(wv, wo, precision=_HIGHEST)              # (P, P)
        c_i = jnp.dot(bv, wo, precision=_HIGHEST) + bo         # (1, P)
        a = jnp.dot(a, m_i, precision=_HIGHEST)
        d = jnp.dot(d, m_i, precision=_HIGHEST) + c_i
        w_eff = w_eff + jnp.dot(a, w_stage[:, i + 1, :], precision=_HIGHEST)
        b_eff = b_eff + jnp.dot(d, w_stage[:, i + 1, :], precision=_HIGHEST)
    return w_eff, b_eff


def vis_output_attention_forward(params, data, *, block_rows=8192,
                                 compute_dtype=jnp.float32,
                                 xla_small_batch_rows=0):
    """data: (B, P, F) with P == var_num and F == 1  ->  (B, d_model, F)."""
    B, P, F = data.shape
    assert F == 1, "VisOutputAttentionLayer's out_linear requires F == 1"
    w_out, _ = params["out"]
    d_model = w_out.shape[1]

    w_eff, b_eff = _collapse_to_affine(params, P)       # (P, Dm), (1, Dm)

    # 'b p f -> b f p' with F == 1  ==  squeeze to (B, P).
    x = data.reshape(B, P).astype(jnp.float32)

    # Optional tiny-batch bypass (one XLA dot beats any pallas_call fixed
    # overhead).  Disabled by default so the Pallas kernel is exercised.
    if B <= xla_small_batch_rows:
        y = jnp.dot(x, w_eff, precision=_HIGHEST) + b_eff
        return y.reshape(B, d_model, 1)

    # --- lane-dense fold: pack G batch rows onto the 128-lane axis ----------
    if 0 < d_model < 128 and 128 % d_model == 0:
        G = 128 // d_model
    else:
        G = 1                     # fallback: plain (B, Dm) output (masked st.)
    precision = _HIGHEST if compute_dtype == jnp.float32 else None

    Bg = ((B + G - 1) // G) * G
    if Bg != B:                                   # at most G-1 padded rows
        x = jnp.pad(x, ((0, Bg - B), (0, 0)))
    rows = Bg // G
    xf = x.reshape(rows, G * P).astype(compute_dtype)      # free reshape
    GK, GN = G * P, G * d_model

    w_big = jnp.kron(jnp.eye(G, dtype=jnp.float32), w_eff).astype(compute_dtype)
    b_big = jnp.tile(b_eff, (1, G))               # float32, added post-accum

    # --- batch tiling --------------------------------------------------------
    tile_target = max(8, ((block_rows // G) // 8) * 8)     # folded rows / step
    bm = min(rows, tile_target)
    if rows >= 16:
        # keep >= 2 grid steps so both v7x TensorCores get work
        half = ((((rows + 1) // 2) + 7) // 8) * 8
        bm = min(bm, half)
    grid = (pl.cdiv(rows, bm),)                   # ragged last tile is fine

    itemsize = jnp.dtype(compute_dtype).itemsize
    cost = pl.CostEstimate(
        flops=2 * rows * GK * GN,
        transcendentals=0,
        bytes_accessed=(rows * GK * itemsize + GK * GN * itemsize
                        + GN * 4 + rows * GN * 4),
    )

    out = pl.pallas_call(
        partial(_collapsed_gemm_kernel, precision=precision),
        out_shape=jax.ShapeDtypeStruct((rows, GN), jnp.float32),
        grid=grid,
        in_specs=[
            pl.BlockSpec((bm, GK), lambda i: (i, 0)),      # batch tile of x
            pl.BlockSpec((GK, GN), lambda i: (0, 0)),      # resident weight
            pl.BlockSpec((1, GN), lambda i: (0, 0)),       # resident bias
        ],
        out_specs=pl.BlockSpec((bm, GN), lambda i: (i, 0)),
        compiler_params=pltpu.CompilerParams(
            dimension_semantics=("parallel",)),
        cost_estimate=cost,
    )(xf, w_big, b_big)

    y = out.reshape(Bg, d_model)                  # free (contiguous) reshape
    if Bg != B:
        y = y[:B]                                 # drop the <= G-1 pad rows
    return y.reshape(B, d_model, 1)               # 'b f p -> b p f', F == 1


# ----------------------------------------------------------------------------
# Parameter init (deterministic, PyTorch-Linear-style uniform bounds)
# ----------------------------------------------------------------------------
def init_linear(key, fan_in, fan_out):
    kw, kb = jax.random.split(key)
    bound = 1.0 / math.sqrt(fan_in)
    w = jax.random.uniform(kw, (fan_in, fan_out), jnp.float32, -bound, bound)
    b = jax.random.uniform(kb, (1, fan_out), jnp.float32, -bound, bound)
    return w, b


def init_vis_output_attention_layer(key, layer_num, d_model, n_heads, var_num,
                                    d_keys=None):
    d_keys = d_keys or var_num // n_heads
    HK = d_keys * n_heads
    keys = jax.random.split(key, 4 * layer_num + 1)
    attn_params = []
    for i in range(layer_num):
        k0, k1, k2, k3 = keys[4 * i:4 * i + 4]
        wq, bq = init_linear(k0, var_num, HK)   # query_projection (dead, F==1)
        wk, bk = init_linear(k1, var_num, HK)   # key_projection   (dead, F==1)
        wv, bv = init_linear(k2, var_num, HK)   # value_projection
        wo, bo = init_linear(k3, HK, var_num)   # out_projection -> var_num
        attn_params.append((wq, bq, wk, bk, wv, bv, wo, bo))
    w_out, b_out = init_linear(keys[-1], var_num * (layer_num + 1), d_model)
    return {
        "attn": attn_params,
        "out": (w_out, b_out),
        "n_heads": n_heads,
        "d_keys": d_keys,
        "layer_num": layer_num,
    }


# ----------------------------------------------------------------------------
# Pure-JAX reference (full Q/K/V + softmax path) for verification
# ----------------------------------------------------------------------------
def _ref_attention_layer(x, p, n_heads, d_keys):
    wq, bq, wk, bk, wv, bv, wo, bo = p
    B, L, _ = x.shape
    q = (jnp.dot(x, wq, precision=_HIGHEST) + bq).reshape(B, L, n_heads, d_keys)
    k = (jnp.dot(x, wk, precision=_HIGHEST) + bk).reshape(B, L, n_heads, d_keys)
    v = (jnp.dot(x, wv, precision=_HIGHEST) + bv).reshape(B, L, n_heads, d_keys)
    scale = 1.0 / math.sqrt(d_keys)
    scores = jnp.einsum('blhe,bshe->bhls', q, k, precision=_HIGHEST)
    attn = jax.nn.softmax(scale * scores, axis=-1)
    out = jnp.einsum('bhls,bshe->blhe', attn, v,
                     precision=_HIGHEST).reshape(B, L, n_heads * d_keys)
    return jnp.dot(out, wo, precision=_HIGHEST) + bo


def _ref_forward(params, data):
    B, P, F = data.shape
    layer_num = params["layer_num"]
    x = jnp.transpose(data, (0, 2, 1))                       # (B, F, P)
    datas = [x]
    for i in range(layer_num):
        x = _ref_attention_layer(x, params["attn"][i], params["n_heads"],
                                 params["d_keys"])
        datas.append(x)
    cat = jnp.concatenate(datas, axis=1)                     # (B, F*(L+1), P)
    flat = jnp.transpose(cat, (0, 2, 1)).reshape(B, P * F * (layer_num + 1))
    w_out, b_out = params["out"]
    y = jnp.dot(flat, w_out, precision=_HIGHEST) + b_out     # (B, Dm)
    return jnp.transpose(y.reshape(B, 1, -1), (0, 2, 1))     # (B, Dm, F)


# ----------------------------------------------------------------------------
if __name__ == "__main__":
    layer_num = 2
    d_model = 16
    n_heads = 4
    var_num = 32            # attention model dim (P)
    F = 1                   # the module's final Linear requires F == 1

    key = jax.random.PRNGKey(0)
    k_param, k_data = jax.random.split(key)
    params = init_vis_output_attention_layer(k_param, layer_num, d_model,
                                             n_heads, var_num)

    # Small smoke test (B=2): single grid step, lane-folded to 8 padded rows.
    B = 2
    data = jax.random.normal(k_data, (B, var_num, F), dtype=jnp.float32)
    out = jax.block_until_ready(vis_output_attention_forward(params, data))
    ref = jax.block_until_ready(_ref_forward(params, data))
    assert out.shape == (B, d_model, F), out.shape
    assert jnp.allclose(out, ref, rtol=1e-4, atol=1e-4), \
        float(jnp.max(jnp.abs(out - ref)))

    # Larger ragged batch: exercises the lane fold, >=2 grid steps and the
    # cdiv ragged last tile (no full-batch padding round trip).
    B2 = 300
    data2 = jax.random.normal(jax.random.PRNGKey(1), (B2, var_num, F),
                              dtype=jnp.float32)
    out2 = jax.block_until_ready(
        vis_output_attention_forward(params, data2, block_rows=128))
    ref2 = jax.block_until_ready(_ref_forward(params, data2))
    assert out2.shape == (B2, d_model, F), out2.shape
    assert jnp.allclose(out2, ref2, rtol=1e-4, atol=1e-4), \
        float(jnp.max(jnp.abs(out2 - ref2)))

    print("KERNEL_OK")
</pallas_src>

<mosaic_0001>
module attributes {stable_mosaic.version = 11 : i64} {
  func.func @_collapsed_gemm_kernel(%arg0: i32, %arg1: memref<1x256xf32, #tpu.memory_space<vmem>>, %arg2: memref<256x128xf32, #tpu.memory_space<vmem>>, %arg3: memref<1x128xf32, #tpu.memory_space<vmem>>, %arg4: memref<1x128xf32, #tpu.memory_space<vmem>>) attributes {dimension_semantics = [#tpu.dimension_semantics<parallel>], iteration_bounds = array<i64: 1>, scalar_prefetch = 0 : i64, scratch_operands = 0 : i64, tpu.core_type = #tpu.core_type<tc>, window_params = [{transform_indices = @transform_0, window_bounds = array<i64: 1, 256>}, {pipeline_mode = #tpu.pipeline_mode<synchronous>, transform_indices = @transform_1, window_bounds = array<i64: 256, 128>}, {pipeline_mode = #tpu.pipeline_mode<synchronous>, transform_indices = @transform_2, window_bounds = array<i64: 1, 128>}, {transform_indices = @transform_3, window_bounds = array<i64: 1, 128>}]} {
    %c0 = arith.constant 0 : index
    %c0_0 = arith.constant 0 : index
    %0 = vector.load %arg1[%c0, %c0_0] : memref<1x256xf32, #tpu.memory_space<vmem>>, vector<1x256xf32>
    %c0_1 = arith.constant 0 : index
    %c0_2 = arith.constant 0 : index
    %1 = vector.load %arg2[%c0_1, %c0_2] : memref<256x128xf32, #tpu.memory_space<vmem>>, vector<256x128xf32>
    %cst = arith.constant dense<0.000000e+00> : vector<1x128xf32>
    %2 = tpu.matmul %0, %1, %cst {dimension_numbers = #tpu.dot_dimension_numbers<[1], [0], [0], [1], [0, 0, 1, 1], [], []>, precision = #tpu.contract_precision<fp32>} : vector<1x256xf32>, vector<256x128xf32>, vector<1x128xf32> -> vector<1x128xf32>
    %c0_3 = arith.constant 0 : index
    %c0_4 = arith.constant 0 : index
    %3 = vector.load %arg3[%c0_3, %c0_4] : memref<1x128xf32, #tpu.memory_space<vmem>>, vector<1x128xf32>
    %4 = arith.addf %2, %3 : vector<1x128xf32>
    %c0_5 = arith.constant 0 : index
    %c0_6 = arith.constant 0 : index
    %5 = vector.load %arg4[%c0_5, %c0_6] : memref<1x128xf32, #tpu.memory_space<vmem>>, vector<1x128xf32>
    tpu.vector_store %arg4[%c0_5, %c0_6], %4 {strides = array<i32>} : memref<1x128xf32, #tpu.memory_space<vmem>>, vector<1x128xf32>,
    return
  }
  func.func @transform_0(%arg0: i32) -> (i32, i32) {
    %c0_i32 = arith.constant 0 : i32
    %c0_i32_0 = arith.constant 0 : i32
    return %arg0, %c0_i32 : i32, i32
  }
  func.func @transform_1(%arg0: i32) -> (i32, i32) {
    %c0_i32 = arith.constant 0 : i32
    %c0_i32_0 = arith.constant 0 : i32
    %c0_i32_1 = arith.constant 0 : i32
    return %c0_i32, %c0_i32_0 : i32, i32
  }
  func.func @transform_2(%arg0: i32) -> (i32, i32) {
    %c0_i32 = arith.constant 0 : i32
    %c0_i32_0 = arith.constant 0 : i32
    %c0_i32_1 = arith.constant 0 : i32
    return %c0_i32, %c0_i32_0 : i32, i32
  }
  func.func @transform_3(%arg0: i32) -> (i32, i32) {
    %c0_i32 = arith.constant 0 : i32
    %c0_i32_0 = arith.constant 0 : i32
    return %arg0, %c0_i32 : i32, i32
  }
}

</mosaic_0001>

<llo_original>
// kernel: tpu_custom_call.1
$region0: #{tpu_custom_call.1}
  #allocation0 [shape = 'u32[]', space=smem, size = 0x4, offset = 0x4, fixed_abs, tag = 'smem constant byte address 0x4 - core index']
  #allocation1 [shape = 'u32[144,128]{1,0:T(1,128)}', space=vmem, size = 0x12000, scoped, tag = 'internal scratch']
  %s0 = inlined_call_operand.hbm [shape: f32[1,256], index: 0, kind: input, shape index: {}]
  %s1 = inlined_call_operand.hbm [shape: f32[256,128], index: 1, kind: input, shape index: {}]
  %s2 = inlined_call_operand.vmem [shape: f32[1,128], index: 2, kind: input, shape index: {}]
  %s3 = inlined_call_operand.hbm [shape: f32[1,128], index: 3, kind: output, shape index: {}]
  %s4 = sld [smem:[#allocation0]]
  $region30: #{tpu_custom_call.1} parent=0
    _
  %s6 = ssub.s32 1, %s4
  %s7 = scalar_select 0, %s6, %s4
  $region1: #{tpu_custom_call.1} parent=0
    #allocation2 [shape = 'u8[1024]{0}', space=vmem, size = 0x400, scoped, tag = 'input window, operand 0, single buffered']
    #allocation3 [shape = 's32[1]{0}', space=sflag, size = 0x4, scoped, tag = 'scoped memory for tpu_custom_call.1']
    #allocation4 [shape = 's32[1]{0}', space=sflag, size = 0x4, scoped, tag = 'scoped memory for tpu_custom_call.1']
    #allocation5 [shape = 'u8[131072]{0}', space=vmem, size = 0x20000, scoped, tag = 'input window, operand 1, single buffered']
    #allocation6 [shape = 's32[1]{0}', space=sflag, size = 0x4, scoped, tag = 'scoped memory for tpu_custom_call.1']
    #allocation7 [shape = 'u8[512]{0}', space=vmem, size = 0x400, scoped, tag = 'output window, operand 0, single buffered']
    %8 = vsyncpa [#allocation3], 0
    %9 = vsyncpa [#allocation6], 0
    %10 = vsyncpa [#allocation4], 0
    // Predicated region
    $region2: #{tpu_custom_call.1} parent=1 // pred_check
      _
    $region3: #{tpu_custom_call.1} parent=1 // pred_check_branch
      %12 = sbr.rel (0) target = $region5
    $region4: #{tpu_custom_call.1} parent=1 // pred_region
      %s14 = ssub.s32 32, 32
      %15 = vsyncadd [#allocation3], %s14
      %s17 = sshll.u32 [#allocation2], 4
      %s18 = int_to_ptr.vmem [resolvable:$true] %s17
      %20 = dma.hbm_to_vmem [thread:$0]  %s0, 32, %s18, [#allocation3]
    $region5: #{tpu_custom_call.1} parent=1 // pred_fallthru
      _
    // Predicated region
    $region6: #{tpu_custom_call.1} parent=1 // pred_check
      _
    $region7: #{tpu_custom_call.1} parent=1 // pred_check_branch
      %22 = sbr.rel (0) target = $region9
    $region8: #{tpu_custom_call.1} parent=1 // pred_region
      %s24 = ssub.s32 4096, 4096
      %25 = vsyncadd [#allocation6], %s24
      %s26 = sshll.u32 [#allocation5], 4
      %s27 = int_to_ptr.vmem [resolvable:$true] %s26
      %32 = dma.hbm_to_vmem [thread:$0]  %s1, 4096, %s27, [#allocation6], 128, 128, 8
    $region9: #{tpu_custom_call.1} parent=1 // pred_fallthru
      _
    // Predicated region
    $region10: #{tpu_custom_call.1} parent=1 // pred_check
      _
    $region11: #{tpu_custom_call.1} parent=1 // pred_check_branch
      %34 = sbr.rel (0) target = $region13
    $region12: #{tpu_custom_call.1} parent=1 // pred_region
      _
    $region13: #{tpu_custom_call.1} parent=1 // pred_fallthru
      _
    // Predicated region
    $region14: #{tpu_custom_call.1} parent=1 // pred_check
      _
    $region15: #{tpu_custom_call.1} parent=1 // pred_check_branch
      %36 = sbr.rel (0) target = $region17
    $region16: #{tpu_custom_call.1} parent=1 // pred_region
      %37 = dma.done [#allocation3], 32
    $region17: #{tpu_custom_call.1} parent=1 // pred_fallthru
      _
    // Predicated region
    $region18: #{tpu_custom_call.1} parent=1 // pred_check
      _
    $region19: #{tpu_custom_call.1} parent=1 // pred_check_branch
      %39 = sbr.rel (0) target = $region21
    $region20: #{tpu_custom_call.1} parent=1 // pred_region
      %40 = dma.done [#allocation6], 4096
    $region21: #{tpu_custom_call.1} parent=1 // pred_fallthru
      _
    %v41 = vld [vmem:[#allocation2] sm:$0x3]
    %v42 = vld [vmem:[#allocation5] sm:$0xff]
    %v43 = vld [vmem:[#allocation5 + $0x8] sm:$0xff]
    %v44 = vld [vmem:[#allocation5 + $0x10] sm:$0xff]
    %v45 = vld [vmem:[#allocation5 + $0x18] sm:$0xff]
    %v46 = vld [vmem:[#allocation5 + $0x20] sm:$0xff]
    %v47 = vld [vmem:[#allocation5 + $0x28] sm:$0xff]
    %v48 = vld [vmem:[#allocation5 + $0x30] sm:$0xff]
    %v49 = vld [vmem:[#allocation5 + $0x38] sm:$0xff]
    %v50 = vld [vmem:[#allocation5 + $0x40] sm:$0xff]
    %v51 = vld [vmem:[#allocation5 + $0x48] sm:$0xff]
    %v52 = vld [vmem:[#allocation5 + $0x50] sm:$0xff]
    %v53 = vld [vmem:[#allocation5 + $0x58] sm:$0xff]
    %v54 = vld [vmem:[#allocation5 + $0x60] sm:$0xff]
    %v55 = vld [vmem:[#allocation5 + $0x68] sm:$0xff]
    %v56 = vld [vmem:[#allocation5 + $0x70] sm:$0xff]
    %v57 = vld [vmem:[#allocation5 + $0x78] sm:$0xff]
    %v58 = vld [vmem:[#allocation5 + $0x80] sm:$0xff]
    %v59 = vld [vmem:[#allocation5 + $0x88] sm:$0xff]
    %v60 = vld [vmem:[#allocation5 + $0x90] sm:$0xff]
    %v61 = vld [vmem:[#allocation5 + $0x98] sm:$0xff]
    %v62 = vld [vmem:[#allocation5 + $0xa0] sm:$0xff]
    %v63 = vld [vmem:[#allocation5 + $0xa8] sm:$0xff]
    %v64 = vld [vmem:[#allocation5 + $0xb0] sm:$0xff]
    %v65 = vld [vmem:[#allocation5 + $0xb8] sm:$0xff]
    %v66 = vld [vmem:[#allocation5 + $0xc0] sm:$0xff]
    %v67 = vld [vmem:[#allocation5 + $0xc8] sm:$0xff]
    %v68 = vld [vmem:[#allocation5 + $0xd0] sm:$0xff]
    %v69 = vld [vmem:[#allocation5 + $0xd8] sm:$0xff]
    %v70 = vld [vmem:[#allocation5 + $0xe0] sm:$0xff]
    %v71 = vld [vmem:[#allocation5 + $0xe8] sm:$0xff]
    %v72 = vld [vmem:[#allocation5 + $0xf0] sm:$0xff]
    %v73 = vld [vmem:[#allocation5 + $0xf8] sm:$0xff]
    %v74 = vld [vmem:[%s2] sm:$0x1]
    %v76 = vlaneseq
    %v77 = vshrl.u32 %v76, 7
    %v78 = vsub.s32 0, %v77
    %v79 = vrot.slane %v41, %v78
    %v80 = vlaneseq
    %v81 = vshrl.u32 %v80, 7
    %v82 = vsub.s32 1, %v81
    %v83 = vrot.slane %v41, %v82
    %86 = vmatprep.subr.mxu0 0.0
    %v87 = vand.u32 %v57, 4294901760
    %88 = vmatpush1.msra.mxu0 %v87
    %89 = vmatprep.subr.mxu0 0.0
    %v90 = vand.u32 %v56, 4294901760
    %91 = vmatpush1.msra.mxu0 %v90
    %92 = vmatprep.subr.mxu0 0.0
    %v93 = vand.u32 %v55, 4294901760
    %94 = vmatpush1.msra.mxu0 %v93
    %95 = vmatprep.subr.mxu0 0.0
    %v96 = vand.u32 %v54, 4294901760
    %97 = vmatpush1.msra.mxu0 %v96
    %98 = vmatprep.subr.mxu0 0.0
    %v99 = vand.u32 %v53, 4294901760
    %100 = vmatpush1.msra.mxu0 %v99
    %101 = vmatprep.subr.mxu0 0.0
    %v102 = vand.u32 %v52, 4294901760
    %103 = vmatpush1.msra.mxu0 %v102
    %104 = vmatprep.subr.mxu0 0.0
    %v105 = vand.u32 %v51, 4294901760
    %106 = vmatpush1.msra.mxu0 %v105
    %107 = vmatprep.subr.mxu0 0.0
    %v108 = vand.u32 %v50, 4294901760
    %109 = vmatpush1.msra.mxu0 %v108
    %110 = vmatprep.subr.mxu0 0.0
    %v111 = vand.u32 %v49, 4294901760
    %112 = vmatpush1.msra.mxu0 %v111
    %113 = vmatprep.subr.mxu0 0.0
    %v114 = vand.u32 %v48, 4294901760
    %115 = vmatpush1.msra.mxu0 %v114
    %116 = vmatprep.subr.mxu0 0.0
    %v117 = vand.u32 %v47, 4294901760
    %118 = vmatpush1.msra.mxu0 %v117
    %119 = vmatprep.subr.mxu0 0.0
    %v120 = vand.u32 %v46, 4294901760
    %121 = vmatpush1.msra.mxu0 %v120
    %122 = vmatprep.subr.mxu0 0.0
    %v123 = vand.u32 %v45, 4294901760
    %124 = vmatpush1.msra.mxu0 %v123
    %125 = vmatprep.subr.mxu0 0.0
    %v126 = vand.u32 %v44, 4294901760
    %127 = vmatpush1.msra.mxu0 %v126
    %128 = vmatprep.subr.mxu0 0.0
    %v129 = vand.u32 %v43, 4294901760
    %130 = vmatpush1.msra.mxu0 %v129
    %131 = vmatprep.subr.mxu0 0.0
    %v132 = vand.u32 %v42, 4294901760
    %133 = vmatpush1.msra.mxu0 %v132
    %134 = vmatprep.subr.mxu0 0.0
    %v135 = vand.u32 %v73, 4294901760
    %136 = vmatpush2.msra.mxu0 %v135
    %137 = vmatprep.subr.mxu0 0.0
    %v138 = vand.u32 %v72, 4294901760
    %139 = vmatpush2.msra.mxu0 %v138
    %140 = vmatprep.subr.mxu0 0.0
    %v141 = vand.u32 %v71, 4294901760
    %142 = vmatpush2.msra.mxu0 %v141
    %143 = vmatprep.subr.mxu0 0.0
    %v144 = vand.u32 %v70, 4294901760
    %145 = vmatpush2.msra.mxu0 %v144
    %146 = vmatprep.subr.mxu0 0.0
    %v147 = vand.u32 %v69, 4294901760
    %148 = vmatpush2.msra.mxu0 %v147
    %149 = vmatprep.subr.mxu0 0.0
    %v150 = vand.u32 %v68, 4294901760
    %151 = vmatpush2.msra.mxu0 %v150
    %152 = vmatprep.subr.mxu0 0.0
    %v153 = vand.u32 %v67, 4294901760
    %154 = vmatpush2.msra.mxu0 %v153
    %155 = vmatprep.subr.mxu0 0.0
    %v156 = vand.u32 %v66, 4294901760
    %157 = vmatpush2.msra.mxu0 %v156
    %158 = vmatprep.subr.mxu0 0.0
    %v159 = vand.u32 %v65, 4294901760
    %160 = vmatpush2.msra.mxu0 %v159
    %161 = vmatprep.subr.mxu0 0.0
    %v162 = vand.u32 %v64, 4294901760
    %163 = vmatpush2.msra.mxu0 %v162
    %164 = vmatprep.subr.mxu0 0.0
    %v165 = vand.u32 %v63, 4294901760
    %166 = vmatpush2.msra.mxu0 %v165
    %167 = vmatprep.subr.mxu0 0.0
    %v168 = vand.u32 %v62, 4294901760
    %169 = vmatpush2.msra.mxu0 %v168
    %170 = vmatprep.subr.mxu0 0.0
    %v171 = vand.u32 %v61, 4294901760
    %172 = vmatpush2.msra.mxu0 %v171
    %173 = vmatprep.subr.mxu0 0.0
    %v174 = vand.u32 %v60, 4294901760
    %175 = vmatpush2.msra.mxu0 %v174
    %176 = vmatprep.subr.mxu0 0.0
    %v177 = vand.u32 %v59, 4294901760
    %178 = vmatpush2.msra.mxu0 %v177
    %179 = vmatprep.subr.mxu0 0.0
    %v180 = vand.u32 %v58, 4294901760
    %181 = vmatpush2.msra.mxu0 %v180
    %v182 = vand.u32 %v83, 4294901760
    %v183 = vsub.f32 %v83, %v182
    %v184 = vand.u32 %v183, 4294901760
    %v185 = vsub.f32 %v183, %v184
    %v186 = vand.u32 %v185, 4294901760
    %187 = vmatprep.mubr.f32.mxu0 %v186
    %v188 = vand.u32 %v79, 4294901760
    %v189 = vsub.f32 %v79, %v188
    %v190 = vand.u32 %v189, 4294901760
    %v191 = vsub.f32 %v189, %v190
    %v192 = vand.u32 %v191, 4294901760
    %193 = vmatmul.mubr.f32.gmra.mxu0 %v192
    %v194 = vpop.f32.mrf.mxu0
    %v195 = vadd.f32 %v74, %v194
    %v196 = vpop.f32.mrf.mxu0
    %197 = vdwg.mxu0
    %198 = vmatprep.subr.mxu0 0.0
    %v199 = vand.u32 %v57, 4294901760
    %v200 = vsub.f32 %v57, %v199
    %v201 = vand.u32 %v200, 4294901760
    %v202 = vsub.f32 %v200, %v201
    %v203 = vand.u32 %v202, 4294901760
    %204 = vmatpush1.msra.mxu0 %v203
    %205 = vmatprep.subr.mxu0 0.0
    %v206 = vand.u32 %v56, 4294901760
    %v207 = vsub.f32 %v56, %v206
    %v208 = vand.u32 %v207, 4294901760
    %v209 = vsub.f32 %v207, %v208
    %v210 = vand.u32 %v209, 4294901760
    %211 = vmatpush1.msra.mxu0 %v210
    %212 = vmatprep.subr.mxu0 0.0
    %v213 = vand.u32 %v55, 4294901760
    %v214 = vsub.f32 %v55, %v213
    %v215 = vand.u32 %v214, 4294901760
    %v216 = vsub.f32 %v214, %v215
    %v217 = vand.u32 %v216, 4294901760
    %218 = vmatpush1.msra.mxu0 %v217
    %219 = vmatprep.subr.mxu0 0.0
    %v220 = vand.u32 %v54, 4294901760
    %v221 = vsub.f32 %v54, %v220
    %v222 = vand.u32 %v221, 4294901760
    %v223 = vsub.f32 %v221, %v222
    %v224 = vand.u32 %v223, 4294901760
    %225 = vmatpush1.msra.mxu0 %v224
    %226 = vmatprep.subr.mxu0 0.0
    %v227 = vand.u32 %v53, 4294901760
    %v228 = vsub.f32 %v53, %v227
    %v229 = vand.u32 %v228, 4294901760
    %v230 = vsub.f32 %v228, %v229
    %v231 = vand.u32 %v230, 4294901760
    %232 = vmatpush1.msra.mxu0 %v231
    %233 = vmatprep.subr.mxu0 0.0
    %v234 = vand.u32 %v52, 4294901760
    %v235 = vsub.f32 %v52, %v234
    %v236 = vand.u32 %v235, 4294901760
    %v237 = vsub.f32 %v235, %v236
    %v238 = vand.u32 %v237, 4294901760
    %239 = vmatpush1.msra.mxu0 %v238
    %240 = vmatprep.subr.mxu0 0.0
    %v241 = vand.u32 %v51, 4294901760
    %v242 = vsub.f32 %v51, %v241
    %v243 = vand.u32 %v242, 4294901760
    %v244 = vsub.f32 %v242, %v243
    %v245 = vand.u32 %v244, 4294901760
    %246 = vmatpush1.msra.mxu0 %v245
    %247 = vmatprep.subr.mxu0 0.0
    %v248 = vand.u32 %v50, 4294901760
    %v249 = vsub.f32 %v50, %v248
    %v250 = vand.u32 %v249, 4294901760
    %v251 = vsub.f32 %v249, %v250
    %v252 = vand.u32 %v251, 4294901760
    %253 = vmatpush1.msra.mxu0 %v252
    %254 = vmatprep.subr.mxu0 0.0
    %v255 = vand.u32 %v49, 4294901760
    %v256 = vsub.f32 %v49, %v255
    %v257 = vand.u32 %v256, 4294901760
    %v258 = vsub.f32 %v256, %v257
    %v259 = vand.u32 %v258, 4294901760
    %260 = vmatpush1.msra.mxu0 %v259
    %261 = vmatprep.subr.mxu0 0.0
    %v262 = vand.u32 %v48, 4294901760
    %v263 = vsub.f32 %v48, %v262
    %v264 = vand.u32 %v263, 4294901760
    %v265 = vsub.f32 %v263, %v264
    %v266 = vand.u32 %v265, 4294901760
    %267 = vmatpush1.msra.mxu0 %v266
    %268 = vmatprep.subr.mxu0 0.0
    %v269 = vand.u32 %v47, 4294901760
    %v270 = vsub.f32 %v47, %v269
    %v271 = vand.u32 %v270, 4294901760
    %v272 = vsub.f32 %v270, %v271
    %v273 = vand.u32 %v272, 4294901760
    %274 = vmatpush1.msra.mxu0 %v273
    %275 = vmatprep.subr.mxu0 0.0
    %v276 = vand.u32 %v46, 4294901760
    %v277 = vsub.f32 %v46, %v276
    %v278 = vand.u32 %v277, 4294901760
    %v279 = vsub.f32 %v277, %v278
    %v280 = vand.u32 %v279, 4294901760
    %281 = vmatpush1.msra.mxu0 %v280
    %282 = vmatprep.subr.mxu0 0.0
    %v283 = vand.u32 %v45, 4294901760
    %v284 = vsub.f32 %v45, %v283
    %v285 = vand.u32 %v284, 4294901760
    %v286 = vsub.f32 %v284, %v285
    %v287 = vand.u32 %v286, 4294901760
    %288 = vmatpush1.msra.mxu0 %v287
    %289 = vmatprep.subr.mxu0 0.0
    %v290 = vand.u32 %v44, 4294901760
    %v291 = vsub.f32 %v44, %v290
    %v292 = vand.u32 %v291, 4294901760
    %v293 = vsub.f32 %v291, %v292
    %v294 = vand.u32 %v293, 4294901760
    %295 = vmatpush1.msra.mxu0 %v294
    %296 = vmatprep.subr.mxu0 0.0
    %v297 = vand.u32 %v43, 4294901760
    %v298 = vsub.f32 %v43, %v297
    %v299 = vand.u32 %v298, 4294901760
    %v300 = vsub.f32 %v298, %v299
    %v301 = vand.u32 %v300, 4294901760
    %302 = vmatpush1.msra.mxu0 %v301
    %303 = vmatprep.subr.mxu0 0.0
    %v304 = vand.u32 %v42, 4294901760
    %v305 = vsub.f32 %v42, %v304
    %v306 = vand.u32 %v305, 4294901760
    %v307 = vsub.f32 %v305, %v306
    %v308 = vand.u32 %v307, 4294901760
    %309 = vmatpush1.msra.mxu0 %v308
    %310 = vmatprep.subr.mxu0 0.0
    %v311 = vand.u32 %v73, 4294901760
    %v312 = vsub.f32 %v73, %v311
    %v313 = vand.u32 %v312, 4294901760
    %v314 = vsub.f32 %v312, %v313
    %v315 = vand.u32 %v314, 4294901760
    %316 = vmatpush2.msra.mxu0 %v315
    %317 = vmatprep.subr.mxu0 0.0
    %v318 = vand.u32 %v72, 4294901760
    %v319 = vsub.f32 %v72, %v318
    %v320 = vand.u32 %v319, 4294901760
    %v321 = vsub.f32 %v319, %v320
    %v322 = vand.u32 %v321, 4294901760
    %323 = vmatpush2.msra.mxu0 %v322
    %324 = vmatprep.subr.mxu0 0.0
    %v325 = vand.u32 %v71, 4294901760
    %v326 = vsub.f32 %v71, %v325
    %v327 = vand.u32 %v326, 4294901760
    %v328 = vsub.f32 %v326, %v327
    %v329 = vand.u32 %v328, 4294901760
    %330 = vmatpush2.msra.mxu0 %v329
    %331 = vmatprep.subr.mxu0 0.0
    %v332 = vand.u32 %v70, 4294901760
    %v333 = vsub.f32 %v70, %v332
    %v334 = vand.u32 %v333, 4294901760
    %v335 = vsub.f32 %v333, %v334
    %v336 = vand.u32 %v335, 4294901760
    %337 = vmatpush2.msra.mxu0 %v336
    %338 = vmatprep.subr.mxu0 0.0
    %v339 = vand.u32 %v69, 4294901760
    %v340 = vsub.f32 %v69, %v339
    %v341 = vand.u32 %v340, 4294901760
    %v342 = vsub.f32 %v340, %v341
    %v343 = vand.u32 %v342, 4294901760
    %344 = vmatpush2.msra.mxu0 %v343
    %345 = vmatprep.subr.mxu0 0.0
    %v346 = vand.u32 %v68, 4294901760
    %v347 = vsub.f32 %v68, %v346
    %v348 = vand.u32 %v347, 4294901760
    %v349 = vsub.f32 %v347, %v348
    %v350 = vand.u32 %v349, 4294901760
    %351 = vmatpush2.msra.mxu0 %v350
    %352 = vmatprep.subr.mxu0 0.0
    %v353 = vand.u32 %v67, 4294901760
    %v354 = vsub.f32 %v67, %v353
    %v355 = vand.u32 %v354, 4294901760
    %v356 = vsub.f32 %v354, %v355
    %v357 = vand.u32 %v356, 4294901760
    %358 = vmatpush2.msra.mxu0 %v357
    %359 = vmatprep.subr.mxu0 0.0
    %v360 = vand.u32 %v66, 4294901760
    %v361 = vsub.f32 %v66, %v360
    %v362 = vand.u32 %v361, 4294901760
    %v363 = vsub.f32 %v361, %v362
    %v364 = vand.u32 %v363, 4294901760
    %365 = vmatpush2.msra.mxu0 %v364
    %366 = vmatprep.subr.mxu0 0.0
    %v367 = vand.u32 %v65, 4294901760
    %v368 = vsub.f32 %v65, %v367
    %v369 = vand.u32 %v368, 4294901760
    %v370 = vsub.f32 %v368, %v369
    %v371 = vand.u32 %v370, 4294901760
    %372 = vmatpush2.msra.mxu0 %v371
    %373 = vmatprep.subr.mxu0 0.0
    %v374 = vand.u32 %v64, 4294901760
    %v375 = vsub.f32 %v64, %v374
    %v376 = vand.u32 %v375, 4294901760
    %v377 = vsub.f32 %v375, %v376
    %v378 = vand.u32 %v377, 4294901760
    %379 = vmatpush2.msra.mxu0 %v378
    %380 = vmatprep.subr.mxu0 0.0
    %v381 = vand.u32 %v63, 4294901760
    %v382 = vsub.f32 %v63, %v381
    %v383 = vand.u32 %v382, 4294901760
    %v384 = vsub.f32 %v382, %v383
    %v385 = vand.u32 %v384, 4294901760
    %386 = vmatpush2.msra.mxu0 %v385
    %387 = vmatprep.subr.mxu0 0.0
    %v388 = vand.u32 %v62, 4294901760
    %v389 = vsub.f32 %v62, %v388
    %v390 = vand.u32 %v389, 4294901760
    %v391 = vsub.f32 %v389, %v390
    %v392 = vand.u32 %v391, 4294901760
    %393 = vmatpush2.msra.mxu0 %v392
    %394 = vmatprep.subr.mxu0 0.0
    %v395 = vand.u32 %v61, 4294901760
    %v396 = vsub.f32 %v61, %v395
    %v397 = vand.u32 %v396, 4294901760
    %v398 = vsub.f32 %v396, %v397
    %v399 = vand.u32 %v398, 4294901760
    %400 = vmatpush2.msra.mxu0 %v399
    %401 = vmatprep.subr.mxu0 0.0
    %v402 = vand.u32 %v60, 4294901760
    %v403 = vsub.f32 %v60, %v402
    %v404 = vand.u32 %v403, 4294901760
    %v405 = vsub.f32 %v403, %v404
    %v406 = vand.u32 %v405, 4294901760
    %407 = vmatpush2.msra.mxu0 %v406
    %408 = vmatprep.subr.mxu0 0.0
    %v409 = vand.u32 %v59, 4294901760
    %v410 = vsub.f32 %v59, %v409
    %v411 = vand.u32 %v410, 4294901760
    %v412 = vsub.f32 %v410, %v411
    %v413 = vand.u32 %v412, 4294901760
    %414 = vmatpush2.msra.mxu0 %v413
    %415 = vmatprep.subr.mxu0 0.0
    %v416 = vand.u32 %v58, 4294901760
    %v417 = vsub.f32 %v58, %v416
    %v418 = vand.u32 %v417, 4294901760
    %v419 = vsub.f32 %v417, %v418
    %v420 = vand.u32 %v419, 4294901760
    %421 = vmatpush2.msra.mxu0 %v420
    %v422 = vand.u32 %v83, 4294901760
    %423 = vmatprep.mubr.f32.mxu0 %v422
    %v424 = vand.u32 %v79, 4294901760
    %425 = vmatmul.mubr.f32.gmra.mxu0 %v424
    %v426 = vpop.f32.mrf.mxu0
    %v427 = vadd.f32 %v195, %v426
    %v428 = vpop.f32.mrf.mxu0
    %429 = vdwg.mxu0
    %430 = vmatprep.subr.mxu0 0.0
    %v431 = vand.u32 %v57, 4294901760
    %v432 = vsub.f32 %v57, %v431
    %433 = vmatpush1.msra.mxu0 %v432
    %434 = vmatprep.subr.mxu0 0.0
    %v435 = vand.u32 %v56, 4294901760
    %v436 = vsub.f32 %v56, %v435
    %437 = vmatpush1.msra.mxu0 %v436
    %438 = vmatprep.subr.mxu0 0.0
    %v439 = vand.u32 %v55, 4294901760
    %v440 = vsub.f32 %v55, %v439
    %441 = vmatpush1.msra.mxu0 %v440
    %442 = vmatprep.subr.mxu0 0.0
    %v443 = vand.u32 %v54, 4294901760
    %v444 = vsub.f32 %v54, %v443
    %445 = vmatpush1.msra.mxu0 %v444
    %446 = vmatprep.subr.mxu0 0.0
    %v447 = vand.u32 %v53, 4294901760
    %v448 = vsub.f32 %v53, %v447
    %449 = vmatpush1.msra.mxu0 %v448
    %450 = vmatprep.subr.mxu0 0.0
    %v451 = vand.u32 %v52, 4294901760
    %v452 = vsub.f32 %v52, %v451
    %453 = vmatpush1.msra.mxu0 %v452
    %454 = vmatprep.subr.mxu0 0.0
    %v455 = vand.u32 %v51, 4294901760
    %v456 = vsub.f32 %v51, %v455
    %457 = vmatpush1.msra.mxu0 %v456
    %458 = vmatprep.subr.mxu0 0.0
    %v459 = vand.u32 %v50, 4294901760
    %v460 = vsub.f32 %v50, %v459
    %461 = vmatpush1.msra.mxu0 %v460
    %462 = vmatprep.subr.mxu0 0.0
    %v463 = vand.u32 %v49, 4294901760
    %v464 = vsub.f32 %v49, %v463
    %465 = vmatpush1.msra.mxu0 %v464
    %466 = vmatprep.subr.mxu0 0.0
    %v467 = vand.u32 %v48, 4294901760
    %v468 = vsub.f32 %v48, %v467
    %469 = vmatpush1.msra.mxu0 %v468
    %470 = vmatprep.subr.mxu0 0.0
    %v471 = vand.u32 %v47, 4294901760
    %v472 = vsub.f32 %v47, %v471
    %473 = vmatpush1.msra.mxu0 %v472
    %474 = vmatprep.subr.mxu0 0.0
    %v475 = vand.u32 %v46, 4294901760
    %v476 = vsub.f32 %v46, %v475
    %477 = vmatpush1.msra.mxu0 %v476
    %478 = vmatprep.subr.mxu0 0.0
    %v479 = vand.u32 %v45, 4294901760
    %v480 = vsub.f32 %v45, %v479
    %481 = vmatpush1.msra.mxu0 %v480
    %482 = vmatprep.subr.mxu0 0.0
    %v483 = vand.u32 %v44, 4294901760
    %v484 = vsub.f32 %v44, %v483
    %485 = vmatpush1.msra.mxu0 %v484
    %486 = vmatprep.subr.mxu0 0.0
    %v487 = vand.u32 %v43, 4294901760
    %v488 = vsub.f32 %v43, %v487
    %489 = vmatpush1.msra.mxu0 %v488
    %490 = vmatprep.subr.mxu0 0.0
    %v491 = vand.u32 %v42, 4294901760
    %v492 = vsub.f32 %v42, %v491
    %493 = vmatpush1.msra.mxu0 %v492
    %494 = vmatprep.subr.mxu0 0.0
    %v495 = vand.u32 %v73, 4294901760
    %v496 = vsub.f32 %v73, %v495
    %497 = vmatpush2.msra.mxu0 %v496
    %498 = vmatprep.subr.mxu0 0.0
    %v499 = vand.u32 %v72, 4294901760
    %v500 = vsub.f32 %v72, %v499
    %501 = vmatpush2.msra.mxu0 %v500
    %502 = vmatprep.subr.mxu0 0.0
    %v503 = vand.u32 %v71, 4294901760
    %v504 = vsub.f32 %v71, %v503
    %505 = vmatpush2.msra.mxu0 %v504
    %506 = vmatprep.subr.mxu0 0.0
    %v507 = vand.u32 %v70, 4294901760
    %v508 = vsub.f32 %v70, %v507
    %509 = vmatpush2.msra.mxu0 %v508
    %510 = vmatprep.subr.mxu0 0.0
    %v511 = vand.u32 %v69, 4294901760
    %v512 = vsub.f32 %v69, %v511
    %513 = vmatpush2.msra.mxu0 %v512
    %514 = vmatprep.subr.mxu0 0.0
    %v515 = vand.u32 %v68, 4294901760
    %v516 = vsub.f32 %v68, %v515
    %517 = vmatpush2.msra.mxu0 %v516
    %518 = vmatprep.subr.mxu0 0.0
    %v519 = vand.u32 %v67, 4294901760
    %v520 = vsub.f32 %v67, %v519
    %521 = vmatpush2.msra.mxu0 %v520
    %522 = vmatprep.subr.mxu0 0.0
    %v523 = vand.u32 %v66, 4294901760
    %v524 = vsub.f32 %v66, %v523
    %525 = vmatpush2.msra.mxu0 %v524
    %526 = vmatprep.subr.mxu0 0.0
    %v527 = vand.u32 %v65, 4294901760
    %v528 = vsub.f32 %v65, %v527
    %529 = vmatpush2.msra.mxu0 %v528
    %530 = vmatprep.subr.mxu0 0.0
    %v531 = vand.u32 %v64, 4294901760
    %v532 = vsub.f32 %v64, %v531
    %533 = vmatpush2.msra.mxu0 %v532
    %534 = vmatprep.subr.mxu0 0.0
    %v535 = vand.u32 %v63, 4294901760
    %v536 = vsub.f32 %v63, %v535
    %537 = vmatpush2.msra.mxu0 %v536
    %538 = vmatprep.subr.mxu0 0.0
    %v539 = vand.u32 %v62, 4294901760
    %v540 = vsub.f32 %v62, %v539
    %541 = vmatpush2.msra.mxu0 %v540
    %542 = vmatprep.subr.mxu0 0.0
    %v543 = vand.u32 %v61, 4294901760
    %v544 = vsub.f32 %v61, %v543
    %545 = vmatpush2.msra.mxu0 %v544
    %546 = vmatprep.subr.mxu0 0.0
    %v547 = vand.u32 %v60, 4294901760
    %v548 = vsub.f32 %v60, %v547
    %549 = vmatpush2.msra.mxu0 %v548
    %550 = vmatprep.subr.mxu0 0.0
    %v551 = vand.u32 %v59, 4294901760
    %v552 = vsub.f32 %v59, %v551
    %553 = vmatpush2.msra.mxu0 %v552
    %554 = vmatprep.subr.mxu0 0.0
    %v555 = vand.u32 %v58, 4294901760
    %v556 = vsub.f32 %v58, %v555
    %557 = vmatpush2.msra.mxu0 %v556
    %v558 = vand.u32 %v83, 4294901760
    %v559 = vsub.f32 %v83, %v558
    %560 = vmatprep.mubr.f32.mxu0 %v559
    %v561 = vand.u32 %v79, 4294901760
    %v562 = vsub.f32 %v79, %v561
    %563 = vmatmul.mubr.f32.gmra.mxu0 %v562
    %v564 = vpop.f32.mrf.mxu0
    %v565 = vadd.f32 %v427, %v564
    %v566 = vpop.f32.mrf.mxu0
    %567 = vdwg.mxu0
    %568 = vmatprep.subr.mxu0 0.0
    %v569 = vand.u32 %v57, 4294901760
    %570 = vmatpush1.msra.mxu0 %v569
    %571 = vmatprep.subr.mxu0 0.0
    %v572 = vand.u32 %v56, 4294901760
    %573 = vmatpush1.msra.mxu0 %v572
    %574 = vmatprep.subr.mxu0 0.0
    %v575 = vand.u32 %v55, 4294901760
    %576 = vmatpush1.msra.mxu0 %v575
    %577 = vmatprep.subr.mxu0 0.0
    %v578 = vand.u32 %v54, 4294901760
    %579 = vmatpush1.msra.mxu0 %v578
    %580 = vmatprep.subr.mxu0 0.0
    %v581 = vand.u32 %v53, 4294901760
    %582 = vmatpush1.msra.mxu0 %v581
    %583 = vmatprep.subr.mxu0 0.0
    %v584 = vand.u32 %v52, 4294901760
    %585 = vmatpush1.msra.mxu0 %v584
    %586 = vmatprep.subr.mxu0 0.0
    %v587 = vand.u32 %v51, 4294901760
    %588 = vmatpush1.msra.mxu0 %v587
    %589 = vmatprep.subr.mxu0 0.0
    %v590 = vand.u32 %v50, 4294901760
    %591 = vmatpush1.msra.mxu0 %v590
    %592 = vmatprep.subr.mxu0 0.0
    %v593 = vand.u32 %v49, 4294901760
    %594 = vmatpush1.msra.mxu0 %v593
    %595 = vmatprep.subr.mxu0 0.0
    %v596 = vand.u32 %v48, 4294901760
    %597 = vmatpush1.msra.mxu0 %v596
    %598 = vmatprep.subr.mxu0 0.0
    %v599 = vand.u32 %v47, 4294901760
    %600 = vmatpush1.msra.mxu0 %v599
    %601 = vmatprep.subr.mxu0 0.0
    %v602 = vand.u32 %v46, 4294901760
    %603 = vmatpush1.msra.mxu0 %v602
    %604 = vmatprep.subr.mxu0 0.0
    %v605 = vand.u32 %v45, 4294901760
    %606 = vmatpush1.msra.mxu0 %v605
    %607 = vmatprep.subr.mxu0 0.0
    %v608 = vand.u32 %v44, 4294901760
    %609 = vmatpush1.msra.mxu0 %v608
    %610 = vmatprep.subr.mxu0 0.0
    %v611 = vand.u32 %v43, 4294901760
    %612 = vmatpush1.msra.mxu0 %v611
    %613 = vmatprep.subr.mxu0 0.0
    %v614 = vand.u32 %v42, 4294901760
    %615 = vmatpush1.msra.mxu0 %v614
    %616 = vmatprep.subr.mxu0 0.0
    %v617 = vand.u32 %v73, 4294901760
    %618 = vmatpush2.msra.mxu0 %v617
    %619 = vmatprep.subr.mxu0 0.0
    %v620 = vand.u32 %v72, 4294901760
    %621 = vmatpush2.msra.mxu0 %v620
    %622 = vmatprep.subr.mxu0 0.0
    %v623 = vand.u32 %v71, 4294901760
    %624 = vmatpush2.msra.mxu0 %v623
    %625 = vmatprep.subr.mxu0 0.0
    %v626 = vand.u32 %v70, 4294901760
    %627 = vmatpush2.msra.mxu0 %v626
    %628 = vmatprep.subr.mxu0 0.0
    %v629 = vand.u32 %v69, 4294901760
    %630 = vmatpush2.msra.mxu0 %v629
    %631 = vmatprep.subr.mxu0 0.0
    %v632 = vand.u32 %v68, 4294901760
    %633 = vmatpush2.msra.mxu0 %v632
    %634 = vmatprep.subr.mxu0 0.0
    %v635 = vand.u32 %v67, 4294901760
    %636 = vmatpush2.msra.mxu0 %v635
    %637 = vmatprep.subr.mxu0 0.0
    %v638 = vand.u32 %v66, 4294901760
    %639 = vmatpush2.msra.mxu0 %v638
    %640 = vmatprep.subr.mxu0 0.0
    %v641 = vand.u32 %v65, 4294901760
    %642 = vmatpush2.msra.mxu0 %v641
    %643 = vmatprep.subr.mxu0 0.0
    %v644 = vand.u32 %v64, 4294901760
    %645 = vmatpush2.msra.mxu0 %v644
    %646 = vmatprep.subr.mxu0 0.0
    %v647 = vand.u32 %v63, 4294901760
    %648 = vmatpush2.msra.mxu0 %v647
    %649 = vmatprep.subr.mxu0 0.0
    %v650 = vand.u32 %v62, 4294901760
    %651 = vmatpush2.msra.mxu0 %v650
    %652 = vmatprep.subr.mxu0 0.0
    %v653 = vand.u32 %v61, 4294901760
    %654 = vmatpush2.msra.mxu0 %v653
    %655 = vmatprep.subr.mxu0 0.0
    %v656 = vand.u32 %v60, 4294901760
    %657 = vmatpush2.msra.mxu0 %v656
    %658 = vmatprep.subr.mxu0 0.0
    %v659 = vand.u32 %v59, 4294901760
    %660 = vmatpush2.msra.mxu0 %v659
    %661 = vmatprep.subr.mxu0 0.0
    %v662 = vand.u32 %v58, 4294901760
    %663 = vmatpush2.msra.mxu0 %v662
    %v664 = vand.u32 %v83, 4294901760
    %v665 = vsub.f32 %v83, %v664
    %v666 = vand.u32 %v665, 4294901760
    %667 = vmatprep.mubr.f32.mxu0 %v666
    %v668 = vand.u32 %v79, 4294901760
    %v669 = vsub.f32 %v79, %v668
    %v670 = vand.u32 %v669, 4294901760
    %671 = vmatmul.mubr.f32.gmra.mxu0 %v670
    %v672 = vpop.f32.mrf.mxu0
    %v673 = vadd.f32 %v565, %v672
    %v674 = vpop.f32.mrf.mxu0
    %675 = vdwg.mxu0
    %676 = vmatprep.subr.mxu0 0.0
    %v677 = vand.u32 %v57, 4294901760
    %v678 = vsub.f32 %v57, %v677
    %v679 = vand.u32 %v678, 4294901760
    %680 = vmatpush1.msra.mxu0 %v679
    %681 = vmatprep.subr.mxu0 0.0
    %v682 = vand.u32 %v56, 4294901760
    %v683 = vsub.f32 %v56, %v682
    %v684 = vand.u32 %v683, 4294901760
    %685 = vmatpush1.msra.mxu0 %v684
    %686 = vmatprep.subr.mxu0 0.0
    %v687 = vand.u32 %v55, 4294901760
    %v688 = vsub.f32 %v55, %v687
    %v689 = vand.u32 %v688, 4294901760
    %690 = vmatpush1.msra.mxu0 %v689
    %691 = vmatprep.subr.mxu0 0.0
    %v692 = vand.u32 %v54, 4294901760
    %v693 = vsub.f32 %v54, %v692
    %v694 = vand.u32 %v693, 4294901760
    %695 = vmatpush1.msra.mxu0 %v694
    %696 = vmatprep.subr.mxu0 0.0
    %v697 = vand.u32 %v53, 4294901760
    %v698 = vsub.f32 %v53, %v697
    %v699 = vand.u32 %v698, 4294901760
    %700 = vmatpush1.msra.mxu0 %v699
    %701 = vmatprep.subr.mxu0 0.0
    %v702 = vand.u32 %v52, 4294901760
    %v703 = vsub.f32 %v52, %v702
    %v704 = vand.u32 %v703, 4294901760
    %705 = vmatpush1.msra.mxu0 %v704
    %706 = vmatprep.subr.mxu0 0.0
    %v707 = vand.u32 %v51, 4294901760
    %v708 = vsub.f32 %v51, %v707
    %v709 = vand.u32 %v708, 4294901760
    %710 = vmatpush1.msra.mxu0 %v709
    %711 = vmatprep.subr.mxu0 0.0
    %v712 = vand.u32 %v50, 4294901760
    %v713 = vsub.f32 %v50, %v712
    %v714 = vand.u32 %v713, 4294901760
    %715 = vmatpush1.msra.mxu0 %v714
    %716 = vmatprep.subr.mxu0 0.0
    %v717 = vand.u32 %v49, 4294901760
    %v718 = vsub.f32 %v49, %v717
    %v719 = vand.u32 %v718, 4294901760
    %720 = vmatpush1.msra.mxu0 %v719
    %721 = vmatprep.subr.mxu0 0.0
    %v722 = vand.u32 %v48, 4294901760
    %v723 = vsub.f32 %v48, %v722
    %v724 = vand.u32 %v723, 4294901760
    %725 = vmatpush1.msra.mxu0 %v724
    %726 = vmatprep.subr.mxu0 0.0
    %v727 = vand.u32 %v47, 4294901760
    %v728 = vsub.f32 %v47, %v727
    %v729 = vand.u32 %v728, 4294901760
    %730 = vmatpush1.msra.mxu0 %v729
    %731 = vmatprep.subr.mxu0 0.0
    %v732 = vand.u32 %v46, 4294901760
    %v733 = vsub.f32 %v46, %v732
    %v734 = vand.u32 %v733, 4294901760
    %735 = vmatpush1.msra.mxu0 %v734
    %736 = vmatprep.subr.mxu0 0.0
    %v737 = vand.u32 %v45, 4294901760
    %v738 = vsub.f32 %v45, %v737
    %v739 = vand.u32 %v738, 4294901760
    %740 = vmatpush1.msra.mxu0 %v739
    %741 = vmatprep.subr.mxu0 0.0
    %v742 = vand.u32 %v44, 4294901760
    %v743 = vsub.f32 %v44, %v742
    %v744 = vand.u32 %v743, 4294901760
    %745 = vmatpush1.msra.mxu0 %v744
    %746 = vmatprep.subr.mxu0 0.0
    %v747 = vand.u32 %v43, 4294901760
    %v748 = vsub.f32 %v43, %v747
    %v749 = vand.u32 %v748, 4294901760
    %750 = vmatpush1.msra.mxu0 %v749
    %751 = vmatprep.subr.mxu0 0.0
    %v752 = vand.u32 %v42, 4294901760
    %v753 = vsub.f32 %v42, %v752
    %v754 = vand.u32 %v753, 4294901760
    %755 = vmatpush1.msra.mxu0 %v754
    %756 = vmatprep.subr.mxu0 0.0
    %v757 = vand.u32 %v73, 4294901760
    %v758 = vsub.f32 %v73, %v757
    %v759 = vand.u32 %v758, 4294901760
    %760 = vmatpush2.msra.mxu0 %v759
    %761 = vmatprep.subr.mxu0 0.0
    %v762 = vand.u32 %v72, 4294901760
    %v763 = vsub.f32 %v72, %v762
    %v764 = vand.u32 %v763, 4294901760
    %765 = vmatpush2.msra.mxu0 %v764
    %766 = vmatprep.subr.mxu0 0.0
    %v767 = vand.u32 %v71, 4294901760
    %v768 = vsub.f32 %v71, %v767
    %v769 = vand.u32 %v768, 4294901760
    %770 = vmatpush2.msra.mxu0 %v769
    %771 = vmatprep.subr.mxu0 0.0
    %v772 = vand.u32 %v70, 4294901760
    %v773 = vsub.f32 %v70, %v772
    %v774 = vand.u32 %v773, 4294901760
    %775 = vmatpush2.msra.mxu0 %v774
    %776 = vmatprep.subr.mxu0 0.0
    %v777 = vand.u32 %v69, 4294901760
    %v778 = vsub.f32 %v69, %v777
    %v779 = vand.u32 %v778, 4294901760
    %780 = vmatpush2.msra.mxu0 %v779
    %781 = vmatprep.subr.mxu0 0.0
    %v782 = vand.u32 %v68, 4294901760
    %v783 = vsub.f32 %v68, %v782
    %v784 = vand.u32 %v783, 4294901760
    %785 = vmatpush2.msra.mxu0 %v784
    %786 = vmatprep.subr.mxu0 0.0
    %v787 = vand.u32 %v67, 4294901760
    %v788 = vsub.f32 %v67, %v787
    %v789 = vand.u32 %v788, 4294901760
    %790 = vmatpush2.msra.mxu0 %v789
    %791 = vmatprep.subr.mxu0 0.0
    %v792 = vand.u32 %v66, 4294901760
    %v793 = vsub.f32 %v66, %v792
    %v794 = vand.u32 %v793, 4294901760
    %795 = vmatpush2.msra.mxu0 %v794
    %796 = vmatprep.subr.mxu0 0.0
    %v797 = vand.u32 %v65, 4294901760
    %v798 = vsub.f32 %v65, %v797
    %v799 = vand.u32 %v798, 4294901760
    %800 = vmatpush2.msra.mxu0 %v799
    %801 = vmatprep.subr.mxu0 0.0
    %v802 = vand.u32 %v64, 4294901760
    %v803 = vsub.f32 %v64, %v802
    %v804 = vand.u32 %v803, 4294901760
    %805 = vmatpush2.msra.mxu0 %v804
    %806 = vmatprep.subr.mxu0 0.0
    %v807 = vand.u32 %v63, 4294901760
    %v808 = vsub.f32 %v63, %v807
    %v809 = vand.u32 %v808, 4294901760
    %810 = vmatpush2.msra.mxu0 %v809
    %811 = vmatprep.subr.mxu0 0.0
    %v812 = vand.u32 %v62, 4294901760
    %v813 = vsub.f32 %v62, %v812
    %v814 = vand.u32 %v813, 4294901760
    %815 = vmatpush2.msra.mxu0 %v814
    %816 = vmatprep.subr.mxu0 0.0
    %v817 = vand.u32 %v61, 4294901760
    %v818 = vsub.f32 %v61, %v817
    %v819 = vand.u32 %v818, 4294901760
    %820 = vmatpush2.msra.mxu0 %v819
    %821 = vmatprep.subr.mxu0 0.0
    %v822 = vand.u32 %v60, 4294901760
    %v823 = vsub.f32 %v60, %v822
    %v824 = vand.u32 %v823, 4294901760
    %825 = vmatpush2.msra.mxu0 %v824
    %826 = vmatprep.subr.mxu0 0.0
    %v827 = vand.u32 %v59, 4294901760
    %v828 = vsub.f32 %v59, %v827
    %v829 = vand.u32 %v828, 4294901760
    %830 = vmatpush2.msra.mxu0 %v829
    %831 = vmatprep.subr.mxu0 0.0
    %v832 = vand.u32 %v58, 4294901760
    %v833 = vsub.f32 %v58, %v832
    %v834 = vand.u32 %v833, 4294901760
    %835 = vmatpush2.msra.mxu0 %v834
    %v836 = vand.u32 %v83, 4294901760
    %837 = vmatprep.mubr.f32.mxu0 %v836
    %v838 = vand.u32 %v79, 4294901760
    %839 = vmatmul.mubr.f32.gmra.mxu0 %v838
    %v840 = vpop.f32.mrf.mxu0
    %v841 = vadd.f32 %v673, %v840
    %v842 = vpop.f32.mrf.mxu0
    %843 = vdwg.mxu0
    %844 = vmatprep.subr.mxu0 0.0
    %v845 = vand.u32 %v57, 4294901760
    %846 = vmatpush1.msra.mxu0 %v845
    %847 = vmatprep.subr.mxu0 0.0
    %v848 = vand.u32 %v56, 4294901760
    %849 = vmatpush1.msra.mxu0 %v848
    %850 = vmatprep.subr.mxu0 0.0
    %v851 = vand.u32 %v55, 4294901760
    %852 = vmatpush1.msra.mxu0 %v851
    %853 = vmatprep.subr.mxu0 0.0
    %v854 = vand.u32 %v54, 4294901760
    %855 = vmatpush1.msra.mxu0 %v854
    %856 = vmatprep.subr.mxu0 0.0
    %v857 = vand.u32 %v53, 4294901760
    %858 = vmatpush1.msra.mxu0 %v857
    %859 = vmatprep.subr.mxu0 0.0
    %v860 = vand.u32 %v52, 4294901760
    %861 = vmatpush1.msra.mxu0 %v860
    %862 = vmatprep.subr.mxu0 0.0
    %v863 = vand.u32 %v51, 4294901760
    %864 = vmatpush1.msra.mxu0 %v863
    %865 = vmatprep.subr.mxu0 0.0
    %v866 = vand.u32 %v50, 4294901760
    %867 = vmatpush1.msra.mxu0 %v866
    %868 = vmatprep.subr.mxu0 0.0
    %v869 = vand.u32 %v49, 4294901760
    %870 = vmatpush1.msra.mxu0 %v869
    %871 = vmatprep.subr.mxu0 0.0
    %v872 = vand.u32 %v48, 4294901760
    %873 = vmatpush1.msra.mxu0 %v872
    %874 = vmatprep.subr.mxu0 0.0
    %v875 = vand.u32 %v47, 4294901760
    %876 = vmatpush1.msra.mxu0 %v875
    %877 = vmatprep.subr.mxu0 0.0
    %v878 = vand.u32 %v46, 4294901760
    %879 = vmatpush1.msra.mxu0 %v878
    %880 = vmatprep.subr.mxu0 0.0
    %v881 = vand.u32 %v45, 4294901760
    %882 = vmatpush1.msra.mxu0 %v881
    %883 = vmatprep.subr.mxu0 0.0
    %v884 = vand.u32 %v44, 4294901760
    %885 = vmatpush1.msra.mxu0 %v884
    %886 = vmatprep.subr.mxu0 0.0
    %v887 = vand.u32 %v43, 4294901760
    %888 = vmatpush1.msra.mxu0 %v887
    %889 = vmatprep.subr.mxu0 0.0
    %v890 = vand.u32 %v42, 4294901760
    %891 = vmatpush1.msra.mxu0 %v890
    %892 = vmatprep.subr.mxu0 0.0
    %v893 = vand.u32 %v73, 4294901760
    %894 = vmatpush2.msra.mxu0 %v893
    %895 = vmatprep.subr.mxu0 0.0
    %v896 = vand.u32 %v72, 4294901760
    %897 = vmatpush2.msra.mxu0 %v896
    %898 = vmatprep.subr.mxu0 0.0
    %v899 = vand.u32 %v71, 4294901760
    %900 = vmatpush2.msra.mxu0 %v899
    %901 = vmatprep.subr.mxu0 0.0
    %v902 = vand.u32 %v70, 4294901760
    %903 = vmatpush2.msra.mxu0 %v902
    %904 = vmatprep.subr.mxu0 0.0
    %v905 = vand.u32 %v69, 4294901760
    %906 = vmatpush2.msra.mxu0 %v905
    %907 = vmatprep.subr.mxu0 0.0
    %v908 = vand.u32 %v68, 4294901760
    %909 = vmatpush2.msra.mxu0 %v908
    %910 = vmatprep.subr.mxu0 0.0
    %v911 = vand.u32 %v67, 4294901760
    %912 = vmatpush2.msra.mxu0 %v911
    %913 = vmatprep.subr.mxu0 0.0
    %v914 = vand.u32 %v66, 4294901760
    %915 = vmatpush2.msra.mxu0 %v914
    %916 = vmatprep.subr.mxu0 0.0
    %v917 = vand.u32 %v65, 4294901760
    %918 = vmatpush2.msra.mxu0 %v917
    %919 = vmatprep.subr.mxu0 0.0
    %v920 = vand.u32 %v64, 4294901760
    %921 = vmatpush2.msra.mxu0 %v920
    %922 = vmatprep.subr.mxu0 0.0
    %v923 = vand.u32 %v63, 4294901760
    %924 = vmatpush2.msra.mxu0 %v923
    %925 = vmatprep.subr.mxu0 0.0
    %v926 = vand.u32 %v62, 4294901760
    %927 = vmatpush2.msra.mxu0 %v926
    %928 = vmatprep.subr.mxu0 0.0
    %v929 = vand.u32 %v61, 4294901760
    %930 = vmatpush2.msra.mxu0 %v929
    %931 = vmatprep.subr.mxu0 0.0
    %v932 = vand.u32 %v60, 4294901760
    %933 = vmatpush2.msra.mxu0 %v932
    %934 = vmatprep.subr.mxu0 0.0
    %v935 = vand.u32 %v59, 4294901760
    %936 = vmatpush2.msra.mxu0 %v935
    %937 = vmatprep.subr.mxu0 0.0
    %v938 = vand.u32 %v58, 4294901760
    %939 = vmatpush2.msra.mxu0 %v938
    %v940 = vand.u32 %v83, 4294901760
    %941 = vmatprep.mubr.f32.mxu0 %v940
    %v942 = vand.u32 %v79, 4294901760
    %943 = vmatmul.mubr.f32.gmra.mxu0 %v942
    %v944 = vpop.f32.mrf.mxu0
    %v945 = vadd.f32 %v841, %v944
    %v946 = vpop.f32.mrf.mxu0
    %947 = vdwg.mxu0
    %948 = vst [vmem:[#allocation7] sm:$0x1] %v945
    // Predicated region
    $region22: #{tpu_custom_call.1} parent=1 // pred_check
      _
    $region23: #{tpu_custom_call.1} parent=1 // pred_check_branch
      %950 = sbr.rel (0) target = $region25
    $region24: #{tpu_custom_call.1} parent=1 // pred_region
      %s952 = ssub.s32 16, 16
      %953 = vsyncadd [#allocation4], %s952
      %s955 = sshll.u32 [#allocation7], 4
      %s956 = int_to_ptr.vmem [resolvable:$true] %s955
      %958 = dma.vmem_to_hbm [thread:$0]  %s956, 16, %s3, [#allocation4]
    $region25: #{tpu_custom_call.1} parent=1 // pred_fallthru
      _
    // Predicated region
    $region26: #{tpu_custom_call.1} parent=1 // pred_check
      _
    $region27: #{tpu_custom_call.1} parent=1 // pred_check_branch
      %960 = sbr.rel (0) target = $region29
    $region28: #{tpu_custom_call.1} parent=1 // pred_region
      %961 = dma.done [#allocation4], 16
    $region29: #{tpu_custom_call.1} parent=1 // pred_fallthru
      _
    %962 = vsyncpa [#allocation3], 1
    %963 = vsyncpa [#allocation6], 1
    %964 = vsyncpa [#allocation4], 1

</llo_original>
